<compile_context>
chip_gen: v5e
topology: v5e:2x2
jax: 0.10.0
libtpu: 0.0.40
codegen_flags: <defaults>
</compile_context>

<pallas_src>
import math

import numpy as np
import jax
import jax.numpy as jnp
from jax import lax
from jax.experimental import pallas as pl
from jax.experimental.pallas import tpu as pltpu

TRIP_COLS = ['tod', 'road', 'road_prop', 'lng', 'lat', 'weekday', 'seq_i']

_LANES = 128
_TARGET_BLOCK_BYTES = 4 << 20           # ~4 MiB of input per grid step
_VMEM_LIMIT_BYTES = 48 * 1024 * 1024    # actual use ~16 MiB; safe on v7x (64 MiB)
_MIN_PALLAS_GROUPS = 8                  # below this: fused XLA affine instead
_MIN_PALLAS_RAGGED_GROUPS = 32          # ragged shapes need more work to pay off


def _cdiv(a, b):
    return -(-a // b)


def _lcm(a, b):
    return a * b // math.gcd(a, b)


# ----------------------------- Pallas kernel ------------------------------ #
def _affine_kernel(x_ref, slab_ref, o_ref):
    # x_ref / o_ref : (g, p, 128) lane-dense block of the flattened tensor.
    # slab_ref      : (2, p, 128) f32 periodic per-element (scale, shift),
    #                 identical for every group of every block.
    scale = slab_ref[0]                      # (p, 128) f32, loaded once
    shift = slab_ref[1]
    g = x_ref.shape[0]

    def one_group(i):
        # Per-group work keeps any f32 widen temporaries at (p,128) (<=56 KiB)
        # instead of a full-block f32 staging buffer.
        x = x_ref[i].astype(jnp.float32)
        o_ref[i] = (x * scale + shift).astype(o_ref.dtype)

    if g <= 8:
        for i in range(g):                   # tiny static trip count: unroll
            one_group(i)
    else:
        def body(i, carry):
            one_group(i)
            return carry
        lax.fori_loop(0, g, body, 0)


def denormalize_affine(x, scale, shift, *, force_pallas=False,
                       target_block_bytes=_TARGET_BLOCK_BYTES,
                       donate=False):
    """out[..., d] = x[..., d] * scale[d] + shift[d] (lane-dense Pallas path)."""
    orig_shape = x.shape
    D = orig_shape[-1]
    if not jnp.issubdtype(x.dtype, jnp.floating):
        x = x.astype(jnp.float32)
    dtype = x.dtype
    N = x.size

    scale = np.asarray(scale, dtype=np.float32)
    shift = np.asarray(shift, dtype=np.float32)

    if N == 0:
        return x

    # Period (in 128-lane rows) after which the flattened feature pattern
    # repeats; forced to a multiple of the (packed) sublane count so tiles
    # stay sublane-dense (8 for f32, 16 for bf16/f16).
    itemsize = dtype.itemsize
    packing = max(1, 4 // itemsize)
    p = _lcm(8 * packing, D // math.gcd(D, _LANES))     # 56 (f32) / 112 (bf16) for D=7
    group_elems = p * _LANES
    n_groups = _cdiv(N, group_elems)
    pad = n_groups * group_elems - N

    small = N < _MIN_PALLAS_GROUPS * group_elems
    ragged_small = (pad != 0) and (N < _MIN_PALLAS_RAGGED_GROUPS * group_elems)
    if (small or ragged_small) and not force_pallas:
        # Small (or small+ragged) tensor: pallas_call launch overhead and the
        # ragged pad/slice copies dwarf the work -- let XLA fuse the affine
        # (same f32-FMA-then-cast numerics as the kernel).
        s = jnp.asarray(scale)
        m = jnp.asarray(shift)
        return (x.astype(jnp.float32) * s + m).astype(dtype)

    # Groups per block: ~target_block_bytes of *input* per grid step.
    g = max(1, int(target_block_bytes) // (group_elems * itemsize))
    g = min(g, n_groups)

    flat = x.reshape(-1)
    if pad:
        # NOTE: this pad plus the final out[:N] slice each cost one full
        # read+write of the tensor. TODO(synk): manual-DMA masked-tail path
        # (memory_space=pl.ANY + scalar-prefetched valid count) to remove them.
        flat = jnp.pad(flat, (0, pad))
    x3 = flat.reshape(n_groups, p, _LANES)

    # Periodic (scale, shift) slab: element (r, l) corresponds to feature
    # column (r*128 + l) % D; valid for every group because (p*128) % D == 0.
    cols = np.arange(group_elems) % D
    slab = jnp.asarray(
        np.stack([scale[cols], shift[cols]], axis=0).reshape(2, p, _LANES))

    n_blocks = _cdiv(n_groups, g)            # last block may be partial (masked)
    extra = {}
    if donate:
        # Caller promises `x` may be overwritten (donate through jit as well).
        extra["input_output_aliases"] = {0: 0}

    out3 = pl.pallas_call(
        _affine_kernel,
        out_shape=jax.ShapeDtypeStruct((n_groups, p, _LANES), dtype),
        grid_spec=pltpu.PrefetchScalarGridSpec(
            num_scalar_prefetch=0,
            grid=(n_blocks,),
            in_specs=[
                pl.BlockSpec((g, p, _LANES), lambda i: (i, 0, 0)),
                pl.BlockSpec((2, p, _LANES), lambda i: (0, 0, 0)),
            ],
            out_specs=pl.BlockSpec((g, p, _LANES), lambda i: (i, 0, 0)),
        ),
        compiler_params=pltpu.CompilerParams(
            # One independent axis -> megacore-shardable on v7x's 2 TCs.
            dimension_semantics=("parallel",),
            vmem_limit_bytes=_VMEM_LIMIT_BYTES,
        ),
        **extra,
    )(x3, slab)

    out = out3.reshape(-1)
    if pad:
        out = out[:N]
    return out.reshape(orig_shape)


# --------------------------- Denormalizer module -------------------------- #
class Denormalizer:
    """JAX/Pallas port of the PyTorch Denormalizer."""

    def __init__(self, stat, feat_cols, feat_names=None, norm_type='zscore'):
        # stat: dict of dicts, e.g. stat['std']['lng'] (stands in for the
        # pandas DataFrame .loc['std', 'lng'] access of the original).
        self.stat = stat
        self.feat_cols = feat_cols
        self.feat_names = (feat_names if feat_names is not None
                           else [TRIP_COLS[c] for c in feat_cols])
        self.norm_type = norm_type

    def _affine_for(self, name):
        """Return (s, m) such that denorm(x) == x * s + m for column `name`."""
        if self.norm_type == 'zscore':
            return float(self.stat['std'][name]), float(self.stat['mean'][name])
        elif self.norm_type == 'minmax':
            lo = float(self.stat['min'][name])
            hi = float(self.stat['max'][name])
            # (x+1)/2 * (hi-lo) + lo  ==  x*(hi-lo)/2 + (hi-lo)/2 + lo
            return (hi - lo) / 2.0, (hi - lo) / 2.0 + lo
        else:
            raise NotImplementedError(self.norm_type)

    def __call__(self, select_cols, arr, *, force_pallas=False,
                 target_block_bytes=_TARGET_BLOCK_BYTES, donate=False):
        x = jnp.asarray(arr)
        if not jnp.issubdtype(x.dtype, jnp.floating):
            x = x.astype(jnp.float32)
        D = x.shape[-1]
        scale = np.ones((D,), dtype=np.float32)
        shift = np.zeros((D,), dtype=np.float32)

        if select_cols is None:
            # Whole-tensor sequential denorm composes into a single affine map
            # (algebraically identical; only tiny f32 rounding-order diffs).
            s_tot, m_tot = 1.0, 0.0
            for name in self.feat_names:
                s, m = self._affine_for(name)
                s_tot, m_tot = s_tot * s, m_tot * s + m
            scale[:] = s_tot
            shift[:] = m_tot
        else:
            for col, name in zip(self.feat_cols, self.feat_names):
                if col in select_cols:
                    s, m = self._affine_for(name)
                    scale[col] = s
                    shift[col] = m

        return denormalize_affine(x, scale, shift, force_pallas=force_pallas,
                                  target_block_bytes=target_block_bytes,
                                  donate=donate)


# ----------------------------- reference (numpy) -------------------------- #
def reference_forward(stat, feat_cols, feat_names, norm_type, select_cols, arr):
    x = np.array(arr, dtype=np.float32, copy=True)

    def denorm_col(xc, name):
        if norm_type == 'zscore':
            return xc * stat['std'][name] + stat['mean'][name]
        else:
            xc = (xc + 1) / 2
            return xc * (stat['max'][name] - stat['min'][name]) + stat['min'][name]

    for col, name in zip(feat_cols, feat_names):
        if select_cols is None:
            x = denorm_col(x, name)
        elif col in select_cols:
            x[..., col] = denorm_col(x[..., col], name)
    return x


# ----------------------------------- main ---------------------------------- #
if __name__ == "__main__":
    root = jax.random.PRNGKey(0)
    k1, k2, k3, k4 = jax.random.split(root, 4)

    names = TRIP_COLS
    stat = {
        'mean': {n: 0.1 * (i + 1) for i, n in enumerate(names)},
        'std':  {n: 1.0 + 0.25 * i for i, n in enumerate(names)},
        'min':  {n: -1.0 - 0.5 * i for i, n in enumerate(names)},
        'max':  {n: 2.0 + 0.5 * i for i, n in enumerate(names)},
    }
    D = len(names)
    feat_cols = list(range(D))
    select_cols = [0, 3, 4]                 # denorm only tod, lng, lat

    dn_z = Denormalizer(stat, feat_cols, norm_type='zscore')
    dn_mm = Denormalizer(stat, feat_cols, norm_type='minmax')

    # --- case 1: tiny module-native shape (B=2, S=8, D=7), forced Pallas ---
    x_small = jax.random.normal(k1, (2, 8, D), dtype=jnp.float32)
    out1 = jax.block_until_ready(dn_z(select_cols, x_small, force_pallas=True))
    ref1 = reference_forward(stat, feat_cols, dn_z.feat_names, 'zscore',
                             select_cols, np.asarray(x_small))
    np.testing.assert_allclose(np.asarray(out1), ref1, rtol=1e-5, atol=1e-5)

    # --- case 2: select_cols=None (sequential whole-tensor denorm), zscore ---
    out2 = jax.block_until_ready(dn_z(None, x_small, force_pallas=True))
    ref2 = reference_forward(stat, feat_cols, dn_z.feat_names, 'zscore',
                             None, np.asarray(x_small))
    np.testing.assert_allclose(np.asarray(out2), ref2, rtol=1e-4, atol=1e-4)

    # --- case 3: minmax, multi-block grid (3 blocks of 2 groups), no pad ---
    x_med = jax.random.normal(k2, (4, 1536, D), dtype=jnp.float32)   # 6 groups
    out3 = jax.block_until_ready(
        dn_mm(select_cols, x_med, force_pallas=True,
              target_block_bytes=2 * 56 * 128 * 4))
    ref3 = reference_forward(stat, feat_cols, dn_mm.feat_names, 'minmax',
                             select_cols, np.asarray(x_med))
    np.testing.assert_allclose(np.asarray(out3), ref3, rtol=1e-5, atol=1e-5)

    # --- case 4: bf16 kept in bf16, ragged tail + partial last grid block ---
    x_bf = jax.random.normal(k3, (3, 3000, D), dtype=jnp.bfloat16)   # 63000 elems
    out4 = jax.block_until_ready(
        dn_z(select_cols, x_bf, force_pallas=True,
             target_block_bytes=2 * 112 * 128 * 2))
    assert out4.dtype == jnp.bfloat16
    ref4 = reference_forward(stat, feat_cols, dn_z.feat_names, 'zscore',
                             select_cols,
                             np.asarray(jnp.asarray(x_bf, dtype=jnp.float32)))
    np.testing.assert_allclose(np.asarray(out4.astype(jnp.float32)), ref4,
                               rtol=2e-2, atol=5e-2)

    # --- case 5: default path (no force_pallas), aligned, default blocks ---
    x_big = jax.random.normal(k4, (8, 1024, D), dtype=jnp.float32)   # 8 groups
    out5 = jax.block_until_ready(dn_z(select_cols, x_big))
    ref5 = reference_forward(stat, feat_cols, dn_z.feat_names, 'zscore',
                             select_cols, np.asarray(x_big))
    np.testing.assert_allclose(np.asarray(out5), ref5, rtol=1e-5, atol=1e-5)

    print("KERNEL_OK")
</pallas_src>

<mosaic_0001>
module attributes {stable_mosaic.version = 11 : i64} {
  func.func @_affine_kernel(%arg0: i32, %arg1: memref<1x56x128xf32, #tpu.memory_space<vmem>>, %arg2: memref<2x56x128xf32, #tpu.memory_space<vmem>>, %arg3: memref<1x56x128xf32, #tpu.memory_space<vmem>>) attributes {dimension_semantics = [#tpu.dimension_semantics<parallel>], iteration_bounds = array<i64: 1>, scalar_prefetch = 0 : i64, scratch_operands = 0 : i64, tpu.core_type = #tpu.core_type<tc>, window_params = [{transform_indices = @transform_0, window_bounds = array<i64: 1, 56, 128>}, {pipeline_mode = #tpu.pipeline_mode<synchronous>, transform_indices = @transform_1, window_bounds = array<i64: 2, 56, 128>}, {transform_indices = @transform_2, window_bounds = array<i64: 1, 56, 128>}]} {
    %c0 = arith.constant 0 : index
    %c0_0 = arith.constant 0 : index
    %c0_1 = arith.constant 0 : index
    %0 = vector.load %arg2[%c0, %c0_0, %c0_1] : memref<2x56x128xf32, #tpu.memory_space<vmem>>, vector<1x56x128xf32>
    %1 = vector.shape_cast %0 : vector<1x56x128xf32> to vector<56x128xf32>
    %c1 = arith.constant 1 : index
    %c0_2 = arith.constant 0 : index
    %c0_3 = arith.constant 0 : index
    %2 = vector.load %arg2[%c1, %c0_2, %c0_3] : memref<2x56x128xf32, #tpu.memory_space<vmem>>, vector<1x56x128xf32>
    %3 = vector.shape_cast %2 : vector<1x56x128xf32> to vector<56x128xf32>
    %c0_4 = arith.constant 0 : index
    %c0_5 = arith.constant 0 : index
    %c0_6 = arith.constant 0 : index
    %4 = vector.load %arg1[%c0_4, %c0_5, %c0_6] : memref<1x56x128xf32, #tpu.memory_space<vmem>>, vector<1x56x128xf32>
    %5 = vector.shape_cast %4 : vector<1x56x128xf32> to vector<56x128xf32>
    %6 = arith.mulf %5, %1 : vector<56x128xf32>
    %7 = arith.addf %6, %3 : vector<56x128xf32>
    %c0_7 = arith.constant 0 : index
    %c0_8 = arith.constant 0 : index
    %c0_9 = arith.constant 0 : index
    %8 = vector.load %arg3[%c0_7, %c0_8, %c0_9] : memref<1x56x128xf32, #tpu.memory_space<vmem>>, vector<1x56x128xf32>
    %9 = vector.shape_cast %8 : vector<1x56x128xf32> to vector<56x128xf32>
    %10 = vector.shape_cast %7 : vector<56x128xf32> to vector<1x56x128xf32>
    tpu.vector_store %arg3[%c0_7, %c0_8, %c0_9], %10 {strides = array<i32>} : memref<1x56x128xf32, #tpu.memory_space<vmem>>, vector<1x56x128xf32>,
    return
  }
  func.func @transform_0(%arg0: i32) -> (i32, i32, i32) {
    %c0_i32 = arith.constant 0 : i32
    %c0_i32_0 = arith.constant 0 : i32
    %c0_i32_1 = arith.constant 0 : i32
    return %arg0, %c0_i32, %c0_i32_0 : i32, i32, i32
  }
  func.func @transform_1(%arg0: i32) -> (i32, i32, i32) {
    %c0_i32 = arith.constant 0 : i32
    %c0_i32_0 = arith.constant 0 : i32
    %c0_i32_1 = arith.constant 0 : i32
    %c0_i32_2 = arith.constant 0 : i32
    return %c0_i32, %c0_i32_0, %c0_i32_1 : i32, i32, i32
  }
  func.func @transform_2(%arg0: i32) -> (i32, i32, i32) {
    %c0_i32 = arith.constant 0 : i32
    %c0_i32_0 = arith.constant 0 : i32
    %c0_i32_1 = arith.constant 0 : i32
    return %arg0, %c0_i32, %c0_i32_0 : i32, i32, i32
  }
}

</mosaic_0001>

<llo_original>
// kernel: tpu_custom_call.1
$region0: #{tpu_custom_call.1}
  #allocation0 [shape = 'u32[]', space=smem, size = 0x4, offset = 0x4, fixed_abs, tag = 'smem constant byte address 0x4 - core index']
  #allocation1 [shape = 'u32[72,128]{1,0:T(1,128)}', space=vmem, size = 0x9000, scoped, tag = 'internal scratch']
  %s0 = inlined_call_operand.hbm [shape: f32[1,56,128], index: 0, kind: input, shape index: {}]
  %s1 = inlined_call_operand.hbm [shape: f32[2,56,128], index: 1, kind: input, shape index: {}]
  %s2 = inlined_call_operand.hbm [shape: f32[1,56,128], index: 2, kind: output, shape index: {}]
  %s3 = sld [smem:[#allocation0]]
  $region26: #{tpu_custom_call.1} parent=0
    _
  %s5 = ssub.s32 1, %s3
  %s6 = scalar_select 0, %s5, %s3
  $region1: #{tpu_custom_call.1} parent=0
    #allocation2 [shape = 'u8[28672]{0}', space=vmem, size = 0x7000, scoped, tag = 'input window, operand 0, single buffered']
    #allocation3 [shape = 's32[1]{0}', space=sflag, size = 0x4, scoped, tag = 'scoped memory for tpu_custom_call.1']
    #allocation4 [shape = 's32[1]{0}', space=sflag, size = 0x4, scoped, tag = 'scoped memory for tpu_custom_call.1']
    #allocation5 [shape = 'u8[57344]{0}', space=vmem, size = 0xe000, scoped, tag = 'input window, operand 1, single buffered']
    #allocation6 [shape = 's32[1]{0}', space=sflag, size = 0x4, scoped, tag = 'scoped memory for tpu_custom_call.1']
    #allocation7 [shape = 'u8[28672]{0}', space=vmem, size = 0x7000, scoped, tag = 'output window, operand 0, single buffered']
    %7 = vsyncpa [#allocation3], 0
    %8 = vsyncpa [#allocation6], 0
    %9 = vsyncpa [#allocation4], 0
    // Predicated region
    $region2: #{tpu_custom_call.1} parent=1 // pred_check
      _
    $region3: #{tpu_custom_call.1} parent=1 // pred_check_branch
      %11 = sbr.rel (0) target = $region5
    $region4: #{tpu_custom_call.1} parent=1 // pred_region
      %13 = vsyncadd [#allocation3], 0
      %s14 = sshll.u32 %s0, 4
      %s15 = int_to_ptr.hbm [resolvable:$true] %s14
      %s16 = sshll.u32 [#allocation2], 4
      %s17 = int_to_ptr.vmem [resolvable:$true] %s16
      %22 = dma.hbm_to_vmem [thread:$0]  %s15, 896, %s17, [#allocation3], 128, 128, 8
    $region5: #{tpu_custom_call.1} parent=1 // pred_fallthru
      _
    // Predicated region
    $region6: #{tpu_custom_call.1} parent=1 // pred_check
      _
    $region7: #{tpu_custom_call.1} parent=1 // pred_check_branch
      %24 = sbr.rel (0) target = $region9
    $region8: #{tpu_custom_call.1} parent=1 // pred_region
      %26 = vsyncadd [#allocation6], 0
      %s27 = sshll.u32 %s1, 4
      %s28 = int_to_ptr.hbm [resolvable:$true] %s27
      %s29 = sshll.u32 [#allocation5], 4
      %s30 = int_to_ptr.vmem [resolvable:$true] %s29
      %35 = dma.hbm_to_vmem [thread:$0]  %s28, 1792, %s30, [#allocation6], 128, 128, 8
    $region9: #{tpu_custom_call.1} parent=1 // pred_fallthru
      _
    // Predicated region
    $region10: #{tpu_custom_call.1} parent=1 // pred_check
      _
    $region11: #{tpu_custom_call.1} parent=1 // pred_check_branch
      %37 = sbr.rel (0) target = $region13
    $region12: #{tpu_custom_call.1} parent=1 // pred_region
      %39 = dma.done [#allocation3], 896
    $region13: #{tpu_custom_call.1} parent=1 // pred_fallthru
      _
    // Predicated region
    $region14: #{tpu_custom_call.1} parent=1 // pred_check
      _
    $region15: #{tpu_custom_call.1} parent=1 // pred_check_branch
      %41 = sbr.rel (0) target = $region17
    $region16: #{tpu_custom_call.1} parent=1 // pred_region
      %43 = dma.done [#allocation6], 1792
    $region17: #{tpu_custom_call.1} parent=1 // pred_fallthru
      _
    %v44 = vld [vmem:[#allocation5] sm:$0xff]
    %v45 = vld [vmem:[#allocation5 + $0x8] sm:$0xff]
    %v46 = vld [vmem:[#allocation5 + $0x10] sm:$0xff]
    %v47 = vld [vmem:[#allocation5 + $0x18] sm:$0xff]
    %v48 = vld [vmem:[#allocation5 + $0x20] sm:$0xff]
    %v49 = vld [vmem:[#allocation5 + $0x28] sm:$0xff]
    %v50 = vld [vmem:[#allocation5 + $0x30] sm:$0xff]
    %s51 = scalar_lea.vmem [#allocation5], 56
    %v52 = vld [vmem:[%s51] sm:$0xff]
    %v53 = vld [vmem:[%s51 + $0x8] sm:$0xff]
    %v54 = vld [vmem:[%s51 + $0x10] sm:$0xff]
    %v55 = vld [vmem:[%s51 + $0x18] sm:$0xff]
    %v56 = vld [vmem:[%s51 + $0x20] sm:$0xff]
    %v57 = vld [vmem:[%s51 + $0x28] sm:$0xff]
    %v58 = vld [vmem:[%s51 + $0x30] sm:$0xff]
    %v59 = vld [vmem:[#allocation2] sm:$0xff]
    %v60 = vld [vmem:[#allocation2 + $0x8] sm:$0xff]
    %v61 = vld [vmem:[#allocation2 + $0x10] sm:$0xff]
    %v62 = vld [vmem:[#allocation2 + $0x18] sm:$0xff]
    %v63 = vld [vmem:[#allocation2 + $0x20] sm:$0xff]
    %v64 = vld [vmem:[#allocation2 + $0x28] sm:$0xff]
    %v65 = vld [vmem:[#allocation2 + $0x30] sm:$0xff]
    %v66 = vmul.f32 %v59, %v44
    %v67 = vmul.f32 %v60, %v45
    %v68 = vmul.f32 %v61, %v46
    %v69 = vmul.f32 %v62, %v47
    %v70 = vmul.f32 %v63, %v48
    %v71 = vmul.f32 %v64, %v49
    %v72 = vmul.f32 %v65, %v50
    %v73 = vadd.f32 %v66, %v52
    %v74 = vadd.f32 %v67, %v53
    %v75 = vadd.f32 %v68, %v54
    %v76 = vadd.f32 %v69, %v55
    %v77 = vadd.f32 %v70, %v56
    %v78 = vadd.f32 %v71, %v57
    %v79 = vadd.f32 %v72, %v58
    %80 = vst [vmem:[#allocation7] sm:$0xff] %v73
    %81 = vst [vmem:[#allocation7 + $0x8] sm:$0xff] %v74
    %82 = vst [vmem:[#allocation7 + $0x10] sm:$0xff] %v75
    %83 = vst [vmem:[#allocation7 + $0x18] sm:$0xff] %v76
    %84 = vst [vmem:[#allocation7 + $0x20] sm:$0xff] %v77
    %85 = vst [vmem:[#allocation7 + $0x28] sm:$0xff] %v78
    %86 = vst [vmem:[#allocation7 + $0x30] sm:$0xff] %v79
    // Predicated region
    $region18: #{tpu_custom_call.1} parent=1 // pred_check
      _
    $region19: #{tpu_custom_call.1} parent=1 // pred_check_branch
      %88 = sbr.rel (0) target = $region21
    $region20: #{tpu_custom_call.1} parent=1 // pred_region
      %90 = vsyncadd [#allocation4], 0
      %s91 = sshll.u32 [#allocation7], 4
      %s92 = int_to_ptr.vmem [resolvable:$true] %s91
      %s93 = sshll.u32 %s2, 4
      %s94 = int_to_ptr.hbm [resolvable:$true] %s93
      %99 = dma.vmem_to_hbm [thread:$0]  %s92, 896, %s94, [#allocation4], 128, 128, 8
    $region21: #{tpu_custom_call.1} parent=1 // pred_fallthru
      _
    // Predicated region
    $region22: #{tpu_custom_call.1} parent=1 // pred_check
      _
    $region23: #{tpu_custom_call.1} parent=1 // pred_check_branch
      %101 = sbr.rel (0) target = $region25
    $region24: #{tpu_custom_call.1} parent=1 // pred_region
      %103 = dma.done [#allocation4], 896
    $region25: #{tpu_custom_call.1} parent=1 // pred_fallthru
      _
    %104 = vsyncpa [#allocation3], 1
    %105 = vsyncpa [#allocation6], 1
    %106 = vsyncpa [#allocation4], 1

</llo_original>
